<compile_context>
chip_gen: v6e
topology: v6e:2x2x1
jax: 0.10.0
libtpu: 0.0.40
codegen_flags: <defaults>
</compile_context>

<pallas_src>
import functools
import math

import jax
import jax.numpy as jnp
from jax.experimental import pallas as pl
from jax.experimental.pallas import tpu as pltpu


def _residual_block_kernel(x_ref, cond_ref, d0_ref, mm_ref, mp_ref,
                           wz_ref, bz_ref, wo_ref, bo_ref,
                           out_ref, *, dilation):
    f32 = jnp.float32
    C, BT = x_ref.shape

    # y = x + diffusion_projection(diffusion_step)[0]  (the d[0]-only quirk).
    y = x_ref[...].astype(f32) + d0_ref[...].astype(f32)                # (C, BT)

    # Dilated conv temporal taps via XLU lane rotation + zero-masking of the
    # `dilation` wrapped columns per batch segment (masks built in wrapper).
    y_m = pltpu.roll(y, dilation, 1) * mm_ref[...].astype(f32)          # y[:, t-dil]
    y_p = pltpu.roll(y, BT - dilation, 1) * mp_ref[...].astype(f32)     # y[:, t+dil]

    # Fused (dilated_conv taps + conditioner_projection) matmul:
    #   wz = [w0 | w1 | w2 | wc]  (2C, 3C+E),  a = [y_m; y; y_p; cond]  (3C+E, BT)
    a = jnp.concatenate([y_m, y, y_p, cond_ref[...].astype(f32)], axis=0)
    z = jnp.dot(wz_ref[...], a, preferred_element_type=f32) + bz_ref[...]   # (2C, BT)

    gate = z[:C, :]
    filt = z[C:, :]
    g = jax.nn.sigmoid(gate) * jnp.tanh(filt)                           # (C, BT)

    # output_projection (1x1 conv)
    out = jnp.dot(wo_ref[...], g, preferred_element_type=f32) + bo_ref[...]  # (2C, BT)
    out_ref[...] = out.astype(out_ref.dtype)


def residual_block_forward(x, conditioner, diffusion_step, params, dilation):
    B, _, C, T = x.shape
    E = conditioner.shape[1]
    BT = B * T

    # ---- wrapper-side glue (cheap layout plumbing / tiny matvec) ----
    x0 = x[:, 0]                                                     # (B, C, T)
    x_flat = jnp.transpose(x0, (1, 0, 2)).reshape(C, BT)             # (C, B*T)
    cond_flat = jnp.transpose(conditioner, (1, 0, 2)).reshape(E, BT)

    # diffusion_projection hoisted: only d[0] is used by the forward.
    d0 = (params["diff_w"] @ diffusion_step[0] + params["diff_b"]).reshape(C, 1)

    w_dil = params["dil_w"]                                          # (2C, C, 3)
    wz = jnp.concatenate([w_dil[:, :, 0], w_dil[:, :, 1], w_dil[:, :, 2],
                          params["cond_w"][:, :, 0]], axis=1)        # (2C, 3C+E)
    bz = (params["dil_b"] + params["cond_b"]).reshape(2 * C, 1)      # pre-summed bias
    wo = params["out_w"][:, :, 0]                                    # (2C, C)
    bo = params["out_b"].reshape(2 * C, 1)

    # Zero-masks for the wrapped-around columns of the lane rolls (per batch
    # segment of length T inside the flattened B*T lane axis).
    t_idx = jnp.arange(BT, dtype=jnp.int32) % T
    mask_m = (t_idx >= dilation).astype(x.dtype).reshape(1, BT)
    mask_p = (t_idx < T - dilation).astype(x.dtype).reshape(1, BT)

    def full(shape):
        n = len(shape)
        return pl.BlockSpec(shape, lambda i, _n=n: (0,) * _n)

    out_flat = pl.pallas_call(
        functools.partial(_residual_block_kernel, dilation=dilation),
        out_shape=jax.ShapeDtypeStruct((2 * C, BT), x.dtype),
        grid=(1,),
        in_specs=[
            full((C, BT)),           # x (batch folded into lanes)
            full((E, BT)),           # conditioner
            full((C, 1)),            # d0 = diffusion_projection(...)[0]
            full((1, BT)),           # mask for t-dil tap
            full((1, BT)),           # mask for t+dil tap
            full((2 * C, 3 * C + E)),  # fused conv-taps + conditioner weights
            full((2 * C, 1)),          # fused bias (dil_b + cond_b)
            full((2 * C, C)),          # output_projection weight
            full((2 * C, 1)),          # output_projection bias
        ],
        out_specs=full((2 * C, BT)),
        compiler_params=pltpu.CompilerParams(
            dimension_semantics=("arbitrary",)),
    )(x_flat, cond_flat, d0, mask_m, mask_p, wz, bz, wo, bo)

    residual = jnp.transpose(out_flat[:C].reshape(C, B, T), (1, 0, 2))   # (B, C, T)
    skip = jnp.transpose(out_flat[C:].reshape(C, B, T), (1, 0, 2))       # (B, C, T)

    # Final residual add with PyTorch broadcasting: (B,1,C,T)+(B,C,T) -> (B,B,C,T).
    out = (x + residual) / math.sqrt(2.0)
    return out, skip


def ref_forward(x, conditioner, diffusion_step, params, dilation):
    """Pure-JAX reference mirroring the PyTorch forward exactly."""
    B, _, C, T = x.shape
    with jax.default_matmul_precision("highest"):
        d = diffusion_step @ params["diff_w"].T + params["diff_b"]      # (B, C)
        d = d[:, :, None]                                               # (B, C, 1)
        y = (x + d)[:, 0]                                               # (B, C, T)
        w = params["dil_w"]
        ypad = jnp.pad(y, ((0, 0), (0, 0), (dilation, dilation)))
        conv = sum(
            jnp.einsum("oi,bit->bot", w[:, :, k],
                       ypad[:, :, k * dilation:k * dilation + T],
                       precision=jax.lax.Precision.HIGHEST)
            for k in range(3)
        ) + params["dil_b"][None, :, None]
        cond = jnp.einsum("oe,bet->bot", params["cond_w"][:, :, 0], conditioner,
                          precision=jax.lax.Precision.HIGHEST)
        cond = cond + params["cond_b"][None, :, None]
        z = conv + cond
        g = jax.nn.sigmoid(z[:, :C]) * jnp.tanh(z[:, C:])
        out = jnp.einsum("oi,bit->bot", params["out_w"][:, :, 0], g,
                         precision=jax.lax.Precision.HIGHEST)
        out = out + params["out_b"][None, :, None]
        residual, skip = out[:, :C], out[:, C:]
        return (x + residual) / math.sqrt(2.0), skip


if __name__ == "__main__":
    B, C, E, T, DIL = 2, 16, 32, 128, 2   # residual_channels=16, encoder_hidden=32

    key = jax.random.PRNGKey(0)
    ks = jax.random.split(key, 12)

    x = jax.random.normal(ks[0], (B, 1, C, T), jnp.float32)
    conditioner = jax.random.normal(ks[1], (B, E, T), jnp.float32)
    diffusion_step = jax.random.normal(ks[2], (B, C), jnp.float32)

    def kaiming(k, shape, fan_in):
        return jax.random.normal(k, shape, jnp.float32) * math.sqrt(2.0 / fan_in)

    params = {
        "diff_w": jax.random.normal(ks[3], (C, C), jnp.float32) / math.sqrt(C),
        "diff_b": jax.random.normal(ks[4], (C,), jnp.float32) * 0.1,
        "dil_w": kaiming(ks[5], (2 * C, C, 3), C * 3),
        "dil_b": jax.random.normal(ks[6], (2 * C,), jnp.float32) * 0.1,
        "cond_w": kaiming(ks[7], (2 * C, E, 1), E),
        "cond_b": jax.random.normal(ks[8], (2 * C,), jnp.float32) * 0.1,
        "out_w": kaiming(ks[9], (2 * C, C, 1), C),
        "out_b": jax.random.normal(ks[10], (2 * C,), jnp.float32) * 0.1,
    }

    out, skip = residual_block_forward(x, conditioner, diffusion_step, params, DIL)
    jax.block_until_ready((out, skip))

    assert out.shape == (B, B, C, T) and skip.shape == (B, C, T)

    ref_out, ref_skip = ref_forward(x, conditioner, diffusion_step, params, DIL)
    if not (jnp.allclose(out, ref_out, atol=1e-3, rtol=1e-3)
            and jnp.allclose(skip, ref_skip, atol=1e-3, rtol=1e-3)):
        raise AssertionError(
            f"mismatch: out {float(jnp.max(jnp.abs(out - ref_out)))}, "
            f"skip {float(jnp.max(jnp.abs(skip - ref_skip)))}")

    print("KERNEL_OK")
</pallas_src>

<mosaic_0001>
module attributes {stable_mosaic.version = 11 : i64} {
  func.func @_residual_block_kernel(%arg0: i32, %arg1: memref<16x256xf32, #tpu.memory_space<vmem>>, %arg2: memref<32x256xf32, #tpu.memory_space<vmem>>, %arg3: memref<16x1xf32, #tpu.memory_space<vmem>>, %arg4: memref<1x256xf32, #tpu.memory_space<vmem>>, %arg5: memref<1x256xf32, #tpu.memory_space<vmem>>, %arg6: memref<32x80xf32, #tpu.memory_space<vmem>>, %arg7: memref<32x1xf32, #tpu.memory_space<vmem>>, %arg8: memref<32x16xf32, #tpu.memory_space<vmem>>, %arg9: memref<32x1xf32, #tpu.memory_space<vmem>>, %arg10: memref<32x256xf32, #tpu.memory_space<vmem>>) attributes {dimension_semantics = [#tpu.dimension_semantics<arbitrary>], iteration_bounds = array<i64: 1>, scalar_prefetch = 0 : i64, scratch_operands = 0 : i64, tpu.core_type = #tpu.core_type<tc>, window_params = [{pipeline_mode = #tpu.pipeline_mode<synchronous>, transform_indices = @transform_0, window_bounds = array<i64: 16, 256>}, {pipeline_mode = #tpu.pipeline_mode<synchronous>, transform_indices = @transform_1, window_bounds = array<i64: 32, 256>}, {pipeline_mode = #tpu.pipeline_mode<synchronous>, transform_indices = @transform_2, window_bounds = array<i64: 16, 1>}, {pipeline_mode = #tpu.pipeline_mode<synchronous>, transform_indices = @transform_3, window_bounds = array<i64: 1, 256>}, {pipeline_mode = #tpu.pipeline_mode<synchronous>, transform_indices = @transform_4, window_bounds = array<i64: 1, 256>}, {pipeline_mode = #tpu.pipeline_mode<synchronous>, transform_indices = @transform_5, window_bounds = array<i64: 32, 80>}, {pipeline_mode = #tpu.pipeline_mode<synchronous>, transform_indices = @transform_6, window_bounds = array<i64: 32, 1>}, {pipeline_mode = #tpu.pipeline_mode<synchronous>, transform_indices = @transform_7, window_bounds = array<i64: 32, 16>}, {pipeline_mode = #tpu.pipeline_mode<synchronous>, transform_indices = @transform_8, window_bounds = array<i64: 32, 1>}, {pipeline_mode = #tpu.pipeline_mode<synchronous>, transform_indices = @transform_9, window_bounds = array<i64: 32, 256>}]} {
    %c0 = arith.constant 0 : index
    %c0_0 = arith.constant 0 : index
    %0 = vector.load %arg1[%c0, %c0_0] : memref<16x256xf32, #tpu.memory_space<vmem>>, vector<16x256xf32>
    %c0_1 = arith.constant 0 : index
    %c0_2 = arith.constant 0 : index
    %1 = vector.load %arg3[%c0_1, %c0_2] : memref<16x1xf32, #tpu.memory_space<vmem>>, vector<16x1xf32>
    %2 = vector.broadcast %1 : vector<16x1xf32> to vector<16x256xf32>
    %3 = arith.addf %0, %2 : vector<16x256xf32>
    %c2_i32 = arith.constant 2 : i32
    %4 = tpu.dynamic_rotate %3 by %c2_i32 dim 1 : vector<16x256xf32>, i32 -> vector<16x256xf32>
    %c0_3 = arith.constant 0 : index
    %c0_4 = arith.constant 0 : index
    %5 = vector.load %arg4[%c0_3, %c0_4] : memref<1x256xf32, #tpu.memory_space<vmem>>, vector<1x256xf32>
    %6 = vector.broadcast %5 : vector<1x256xf32> to vector<16x256xf32>
    %7 = arith.mulf %4, %6 : vector<16x256xf32>
    %c254_i32 = arith.constant 254 : i32
    %8 = tpu.dynamic_rotate %3 by %c254_i32 dim 1 : vector<16x256xf32>, i32 -> vector<16x256xf32>
    %c0_5 = arith.constant 0 : index
    %c0_6 = arith.constant 0 : index
    %9 = vector.load %arg5[%c0_5, %c0_6] : memref<1x256xf32, #tpu.memory_space<vmem>>, vector<1x256xf32>
    %10 = vector.broadcast %9 : vector<1x256xf32> to vector<16x256xf32>
    %11 = arith.mulf %8, %10 : vector<16x256xf32>
    %c0_7 = arith.constant 0 : index
    %c0_8 = arith.constant 0 : index
    %12 = vector.load %arg2[%c0_7, %c0_8] : memref<32x256xf32, #tpu.memory_space<vmem>>, vector<32x256xf32>
    %13 = tpu.concatenate %7, %3, %11, %12 in 0 : vector<16x256xf32>, vector<16x256xf32>, vector<16x256xf32>, vector<32x256xf32> -> vector<80x256xf32>
    %c0_9 = arith.constant 0 : index
    %c0_10 = arith.constant 0 : index
    %14 = vector.load %arg6[%c0_9, %c0_10] : memref<32x80xf32, #tpu.memory_space<vmem>>, vector<32x80xf32>
    %cst = arith.constant dense<0.000000e+00> : vector<32x256xf32>
    %15 = tpu.matmul %14, %13, %cst {dimension_numbers = #tpu.dot_dimension_numbers<[1], [0], [0], [1], [0, 0, 1, 1], [], []>} : vector<32x80xf32>, vector<80x256xf32>, vector<32x256xf32> -> vector<32x256xf32>
    %c0_11 = arith.constant 0 : index
    %c0_12 = arith.constant 0 : index
    %16 = vector.load %arg7[%c0_11, %c0_12] : memref<32x1xf32, #tpu.memory_space<vmem>>, vector<32x1xf32>
    %17 = vector.broadcast %16 : vector<32x1xf32> to vector<32x256xf32>
    %18 = arith.addf %15, %17 : vector<32x256xf32>
    %19 = vector.extract_strided_slice %18 {offsets = [0, 0], sizes = [16, 256], strides = [1, 1]} : vector<32x256xf32> to vector<16x256xf32>
    %20 = vector.extract_strided_slice %18 {offsets = [16, 0], sizes = [16, 256], strides = [1, 1]} : vector<32x256xf32> to vector<16x256xf32>
    %21 = arith.negf %19 : vector<16x256xf32>
    %22 = math.exp %21 : vector<16x256xf32>
    %cst_13 = arith.constant 1.000000e+00 : f32
    %23 = vector.broadcast %cst_13 : f32 to vector<16x256xf32>
    %24 = arith.addf %23, %22 : vector<16x256xf32>
    %25 = arith.divf %23, %24 : vector<16x256xf32>
    %26 = math.tanh %20 : vector<16x256xf32>
    %27 = arith.mulf %25, %26 : vector<16x256xf32>
    %c0_14 = arith.constant 0 : index
    %c0_15 = arith.constant 0 : index
    %28 = vector.load %arg8[%c0_14, %c0_15] : memref<32x16xf32, #tpu.memory_space<vmem>>, vector<32x16xf32>
    %cst_16 = arith.constant dense<0.000000e+00> : vector<32x256xf32>
    %29 = tpu.matmul %28, %27, %cst_16 {dimension_numbers = #tpu.dot_dimension_numbers<[1], [0], [0], [1], [0, 0, 1, 1], [], []>} : vector<32x16xf32>, vector<16x256xf32>, vector<32x256xf32> -> vector<32x256xf32>
    %c0_17 = arith.constant 0 : index
    %c0_18 = arith.constant 0 : index
    %30 = vector.load %arg9[%c0_17, %c0_18] : memref<32x1xf32, #tpu.memory_space<vmem>>, vector<32x1xf32>
    %31 = vector.broadcast %30 : vector<32x1xf32> to vector<32x256xf32>
    %32 = arith.addf %29, %31 : vector<32x256xf32>
    %c0_19 = arith.constant 0 : index
    %c0_20 = arith.constant 0 : index
    %33 = vector.load %arg10[%c0_19, %c0_20] : memref<32x256xf32, #tpu.memory_space<vmem>>, vector<32x256xf32>
    tpu.vector_store %arg10[%c0_19, %c0_20], %32 {strides = array<i32>} : memref<32x256xf32, #tpu.memory_space<vmem>>, vector<32x256xf32>,
    return
  }
  func.func @transform_0(%arg0: i32) -> (i32, i32) {
    %c0_i32 = arith.constant 0 : i32
    %c0_i32_0 = arith.constant 0 : i32
    %c0_i32_1 = arith.constant 0 : i32
    return %c0_i32, %c0_i32_0 : i32, i32
  }
  func.func @transform_1(%arg0: i32) -> (i32, i32) {
    %c0_i32 = arith.constant 0 : i32
    %c0_i32_0 = arith.constant 0 : i32
    %c0_i32_1 = arith.constant 0 : i32
    return %c0_i32, %c0_i32_0 : i32, i32
  }
  func.func @transform_2(%arg0: i32) -> (i32, i32) {
    %c0_i32 = arith.constant 0 : i32
    %c0_i32_0 = arith.constant 0 : i32
    %c0_i32_1 = arith.constant 0 : i32
    return %c0_i32, %c0_i32_0 : i32, i32
  }
  func.func @transform_3(%arg0: i32) -> (i32, i32) {
    %c0_i32 = arith.constant 0 : i32
    %c0_i32_0 = arith.constant 0 : i32
    %c0_i32_1 = arith.constant 0 : i32
    return %c0_i32, %c0_i32_0 : i32, i32
  }
  func.func @transform_4(%arg0: i32) -> (i32, i32) {
    %c0_i32 = arith.constant 0 : i32
    %c0_i32_0 = arith.constant 0 : i32
    %c0_i32_1 = arith.constant 0 : i32
    return %c0_i32, %c0_i32_0 : i32, i32
  }
  func.func @transform_5(%arg0: i32) -> (i32, i32) {
    %c0_i32 = arith.constant 0 : i32
    %c0_i32_0 = arith.constant 0 : i32
    %c0_i32_1 = arith.constant 0 : i32
    return %c0_i32, %c0_i32_0 : i32, i32
  }
  func.func @transform_6(%arg0: i32) -> (i32, i32) {
    %c0_i32 = arith.constant 0 : i32
    %c0_i32_0 = arith.constant 0 : i32
    %c0_i32_1 = arith.constant 0 : i32
    return %c0_i32, %c0_i32_0 : i32, i32
  }
  func.func @transform_7(%arg0: i32) -> (i32, i32) {
    %c0_i32 = arith.constant 0 : i32
    %c0_i32_0 = arith.constant 0 : i32
    %c0_i32_1 = arith.constant 0 : i32
    return %c0_i32, %c0_i32_0 : i32, i32
  }
  func.func @transform_8(%arg0: i32) -> (i32, i32) {
    %c0_i32 = arith.constant 0 : i32
    %c0_i32_0 = arith.constant 0 : i32
    %c0_i32_1 = arith.constant 0 : i32
    return %c0_i32, %c0_i32_0 : i32, i32
  }
  func.func @transform_9(%arg0: i32) -> (i32, i32) {
    %c0_i32 = arith.constant 0 : i32
    %c0_i32_0 = arith.constant 0 : i32
    %c0_i32_1 = arith.constant 0 : i32
    return %c0_i32, %c0_i32_0 : i32, i32
  }
}

</mosaic_0001>

<llo_original>
// kernel: tpu_custom_call.1
$region0: #{tpu_custom_call.1}
  #allocation0 [shape = 'u32[]', space=smem, size = 0x4, offset = 0x4, fixed_abs, tag = 'smem constant byte address 0x4 - core index']
  #allocation1 [shape = 'u32[144,128]{1,0:T(1,128)}', space=vmem, size = 0x12000, scoped, tag = 'internal scratch']
  %s0 = inlined_call_operand.vmem [shape: f32[16,256], index: 0, kind: input, shape index: {}]
  %s1 = inlined_call_operand.vmem [shape: f32[32,256], index: 1, kind: input, shape index: {}]
  %s2 = inlined_call_operand.vmem [shape: f32[16,1], index: 2, kind: input, shape index: {}]
  %s3 = inlined_call_operand.vmem [shape: f32[1,256], index: 3, kind: input, shape index: {}]
  %s4 = inlined_call_operand.vmem [shape: f32[1,256], index: 4, kind: input, shape index: {}]
  %s5 = inlined_call_operand.vmem [shape: f32[32,80], index: 5, kind: input, shape index: {}]
  %s6 = inlined_call_operand.vmem [shape: f32[32,1], index: 6, kind: input, shape index: {}]
  %s7 = inlined_call_operand.vmem [shape: f32[32,16], index: 7, kind: input, shape index: {}]
  %s8 = inlined_call_operand.vmem [shape: f32[32,1], index: 8, kind: input, shape index: {}]
  %s9 = inlined_call_operand.hbm [shape: f32[32,256], index: 9, kind: output, shape index: {}]
  %s10 = sld [smem:[#allocation0]]
  $region46: #{tpu_custom_call.1} parent=0
    _
  %s12 = ssub.s32 1, %s10
  %s13 = scalar_select 0, %s12, %s10
  $region1: #{tpu_custom_call.1} parent=0
    #allocation2 [shape = 'u8[32768]{0}', space=vmem, size = 0x8000, scoped, tag = 'output window, operand 0, single buffered']
    #allocation3 [shape = 's32[1]{0}', space=sflag, size = 0x4, scoped, tag = 'scoped memory for tpu_custom_call.1']
    %14 = vsyncpa [#allocation3], 0
    // Predicated region
    $region2: #{tpu_custom_call.1} parent=1 // pred_check
      _
    $region3: #{tpu_custom_call.1} parent=1 // pred_check_branch
      %16 = sbr.rel (0) target = $region5
    $region4: #{tpu_custom_call.1} parent=1 // pred_region
      _
    $region5: #{tpu_custom_call.1} parent=1 // pred_fallthru
      _
    // Predicated region
    $region6: #{tpu_custom_call.1} parent=1 // pred_check
      _
    $region7: #{tpu_custom_call.1} parent=1 // pred_check_branch
      %18 = sbr.rel (0) target = $region9
    $region8: #{tpu_custom_call.1} parent=1 // pred_region
      _
    $region9: #{tpu_custom_call.1} parent=1 // pred_fallthru
      _
    // Predicated region
    $region10: #{tpu_custom_call.1} parent=1 // pred_check
      _
    $region11: #{tpu_custom_call.1} parent=1 // pred_check_branch
      %20 = sbr.rel (0) target = $region13
    $region12: #{tpu_custom_call.1} parent=1 // pred_region
      _
    $region13: #{tpu_custom_call.1} parent=1 // pred_fallthru
      _
    // Predicated region
    $region14: #{tpu_custom_call.1} parent=1 // pred_check
      _
    $region15: #{tpu_custom_call.1} parent=1 // pred_check_branch
      %22 = sbr.rel (0) target = $region17
    $region16: #{tpu_custom_call.1} parent=1 // pred_region
      _
    $region17: #{tpu_custom_call.1} parent=1 // pred_fallthru
      _
    // Predicated region
    $region18: #{tpu_custom_call.1} parent=1 // pred_check
      _
    $region19: #{tpu_custom_call.1} parent=1 // pred_check_branch
      %24 = sbr.rel (0) target = $region21
    $region20: #{tpu_custom_call.1} parent=1 // pred_region
      _
    $region21: #{tpu_custom_call.1} parent=1 // pred_fallthru
      _
    // Predicated region
    $region22: #{tpu_custom_call.1} parent=1 // pred_check
      _
    $region23: #{tpu_custom_call.1} parent=1 // pred_check_branch
      %26 = sbr.rel (0) target = $region25
    $region24: #{tpu_custom_call.1} parent=1 // pred_region
      _
    $region25: #{tpu_custom_call.1} parent=1 // pred_fallthru
      _
    // Predicated region
    $region26: #{tpu_custom_call.1} parent=1 // pred_check
      _
    $region27: #{tpu_custom_call.1} parent=1 // pred_check_branch
      %28 = sbr.rel (0) target = $region29
    $region28: #{tpu_custom_call.1} parent=1 // pred_region
      _
    $region29: #{tpu_custom_call.1} parent=1 // pred_fallthru
      _
    // Predicated region
    $region30: #{tpu_custom_call.1} parent=1 // pred_check
      _
    $region31: #{tpu_custom_call.1} parent=1 // pred_check_branch
      %30 = sbr.rel (0) target = $region33
    $region32: #{tpu_custom_call.1} parent=1 // pred_region
      _
    $region33: #{tpu_custom_call.1} parent=1 // pred_fallthru
      _
    // Predicated region
    $region34: #{tpu_custom_call.1} parent=1 // pred_check
      _
    $region35: #{tpu_custom_call.1} parent=1 // pred_check_branch
      %32 = sbr.rel (0) target = $region37
    $region36: #{tpu_custom_call.1} parent=1 // pred_region
      _
    $region37: #{tpu_custom_call.1} parent=1 // pred_fallthru
      _
    %v33 = vld [vmem:[%s0] sm:$0xff]
    %v34 = vld [vmem:[%s0 + $0x8] sm:$0xff]
    %v35 = vld [vmem:[%s0 + $0x10] sm:$0xff]
    %v36 = vld [vmem:[%s0 + $0x18] sm:$0xff]
    %v37 = vld [vmem:[%s2] sm:$0xff]
    %v38 = vld [vmem:[%s2 + $0x8] sm:$0xff]
    %40 = vset.pattern.permute.xlu0 0
    %41 = vperm.xlu0 %40, %v37
    %v42 = vpop.permute.xlu0 %41
    %45 = vset.pattern.permute.xlu0 0
    %46 = vperm.xlu0 %45, %v38
    %v47 = vpop.permute.xlu0 %46
    %v49 = vadd.f32 %v33, %v42
    %v50 = vadd.f32 %v34, %v42
    %v51 = vadd.f32 %v35, %v47
    %v52 = vadd.f32 %v36, %v47
    %53 = vrot.lane.b32.xlu0 %v49, 2
    %v54 = vpop.permute.xlu0 %53
    %55 = vrot.lane.b32.xlu0 %v51, 2
    %v56 = vpop.permute.xlu0 %55
    %57 = vrot.lane.b32.xlu0 %v50, 2
    %v58 = vpop.permute.xlu0 %57
    %59 = vrot.lane.b32.xlu0 %v52, 2
    %v60 = vpop.permute.xlu0 %59
    %v61 = vlaneseq
    %v62 = vand.u32 %v61, 127
    %vm63 = vcmp.lt.s32.totalorder %v62, 2
    %v64 = vsel %vm63, %v54, %v58
    %v65 = vsel %vm63, %v56, %v60
    %v66 = vsel %vm63, %v58, %v54
    %v67 = vsel %vm63, %v60, %v56
    %v68 = vld [vmem:[%s3] sm:$0x3]
    %v70 = vlaneseq
    %v71 = vshrl.u32 %v70, 7
    %v72 = vsub.s32 0, %v71
    %v73 = vrot.slane %v68, %v72
    %v74 = vlaneseq
    %v75 = vshrl.u32 %v74, 7
    %v76 = vsub.s32 1, %v75
    %v77 = vrot.slane %v68, %v76
    %v80 = vmul.f32 %v66, %v73
    %v81 = vmul.f32 %v64, %v77
    %v82 = vmul.f32 %v67, %v73
    %v83 = vmul.f32 %v65, %v77
    %84 = vrot.lane.b32.xlu0 %v49, 126
    %v85 = vpop.permute.xlu0 %84
    %86 = vrot.lane.b32.xlu0 %v51, 126
    %v87 = vpop.permute.xlu0 %86
    %88 = vrot.lane.b32.xlu0 %v50, 126
    %v89 = vpop.permute.xlu0 %88
    %90 = vrot.lane.b32.xlu0 %v52, 126
    %v91 = vpop.permute.xlu0 %90
    %vm92 = vcmp.lt.s32.totalorder %v62, 126
    %v93 = vsel %vm92, %v85, %v89
    %v94 = vsel %vm92, %v87, %v91
    %v95 = vsel %vm92, %v89, %v85
    %v96 = vsel %vm92, %v91, %v87
    %v97 = vld [vmem:[%s4] sm:$0x3]
    %v99 = vlaneseq
    %v100 = vshrl.u32 %v99, 7
    %v101 = vsub.s32 0, %v100
    %v102 = vrot.slane %v97, %v101
    %v103 = vlaneseq
    %v104 = vshrl.u32 %v103, 7
    %v105 = vsub.s32 1, %v104
    %v106 = vrot.slane %v97, %v105
    %v109 = vmul.f32 %v93, %v102
    %v110 = vmul.f32 %v95, %v106
    %v111 = vmul.f32 %v94, %v102
    %v112 = vmul.f32 %v96, %v106
    %v113 = vld [vmem:[%s1] sm:$0xff]
    %v114 = vld [vmem:[%s1 + $0x8] sm:$0xff]
    %v115 = vld [vmem:[%s1 + $0x10] sm:$0xff]
    %v116 = vld [vmem:[%s1 + $0x18] sm:$0xff]
    %v117 = vld [vmem:[%s1 + $0x20] sm:$0xff]
    %v118 = vld [vmem:[%s1 + $0x28] sm:$0xff]
    %v119 = vld [vmem:[%s1 + $0x30] sm:$0xff]
    %v120 = vld [vmem:[%s1 + $0x38] sm:$0xff]
    %v121 = vld [vmem:[%s5] sm:$0xff]
    %v122 = vld [vmem:[%s5 + $0x8] sm:$0xff]
    %v123 = vld [vmem:[%s5 + $0x10] sm:$0xff]
    %v124 = vld [vmem:[%s5 + $0x18] sm:$0xff]
    %v125 = vld [vmem:[%s6] sm:$0xff]
    %v126 = vld [vmem:[%s6 + $0x8] sm:$0xff]
    %v127 = vld [vmem:[%s6 + $0x10] sm:$0xff]
    %v128 = vld [vmem:[%s6 + $0x18] sm:$0xff]
    %130 = vset.pattern.permute.xlu0 0
    %131 = vperm.xlu0 %130, %v125
    %v132 = vpop.permute.xlu0 %131
    %135 = vset.pattern.permute.xlu0 0
    %136 = vperm.xlu0 %135, %v126
    %v137 = vpop.permute.xlu0 %136
    %140 = vset.pattern.permute.xlu0 0
    %141 = vperm.xlu0 %140, %v127
    %v142 = vpop.permute.xlu0 %141
    %145 = vset.pattern.permute.xlu0 0
    %146 = vperm.xlu0 %145, %v128
    %v147 = vpop.permute.xlu0 %146
    %vm149 = vcmask 654336
    %v151 = vsel %vm149, %v121, 0
    %v154 = vsel %vm149, %v122, 0
    %v157 = vsel %vm149, %v123, 0
    %v160 = vsel %vm149, %v124, 0
    %162 = vmatprep.subr.mxu0 0.0
    %163 = vmatpush1.msra.mxu0 0.0
    %164 = vmatprep.subr.mxu0 0.0
    %165 = vmatpush1.msra.mxu0 0.0
    %166 = vmatprep.subr.mxu0 0.0
    %167 = vmatpush1.msra.mxu0 0.0
    %168 = vmatprep.subr.mxu0 0.0
    %169 = vmatpush1.msra.mxu0 0.0
    %170 = vmatprep.subr.mxu0 0.0
    %171 = vmatpush1.msra.mxu0 0.0
    %172 = vmatprep.subr.mxu0 0.0
    %173 = vmatpush1.msra.mxu0 0.0
    %174 = vmatprep.subr.mxu0 %v120
    %175 = vmatpush1.msra.mxu0 %v119
    %176 = vmatprep.subr.mxu0 %v118
    %177 = vmatpush1.msra.mxu0 %v117
    %178 = vmatprep.subr.mxu0 %v116
    %179 = vmatpush1.msra.mxu0 %v115
    %180 = vmatprep.subr.mxu0 %v114
    %181 = vmatpush1.msra.mxu0 %v113
    %182 = vmatprep.subr.mxu0 %v112
    %183 = vmatpush1.msra.mxu0 %v111
    %184 = vmatprep.subr.mxu0 %v110
    %185 = vmatpush1.msra.mxu0 %v109
    %186 = vmatprep.subr.mxu0 %v52
    %187 = vmatpush1.msra.mxu0 %v51
    %188 = vmatprep.subr.mxu0 %v50
    %189 = vmatpush1.msra.mxu0 %v49
    %190 = vmatprep.subr.mxu0 %v83
    %191 = vmatpush1.msra.mxu0 %v82
    %192 = vmatprep.subr.mxu0 %v81
    %193 = vmatpush1.msra.mxu0 %v80
    %194 = vmatprep.subr.mxu0 0.0
    %195 = vmatpush2.msra.mxu0 0.0
    %196 = vmatprep.subr.mxu0 0.0
    %197 = vmatpush2.msra.mxu0 0.0
    %198 = vmatprep.subr.mxu0 0.0
    %199 = vmatpush2.msra.mxu0 0.0
    %200 = vmatprep.subr.mxu0 0.0
    %201 = vmatpush2.msra.mxu0 0.0
    %202 = vmatprep.subr.mxu0 0.0
    %203 = vmatpush2.msra.mxu0 0.0
    %204 = vmatprep.subr.mxu0 0.0
    %205 = vmatpush2.msra.mxu0 0.0
    %206 = vmatprep.subr.mxu0 0.0
    %207 = vmatpush2.msra.mxu0 0.0
    %208 = vmatprep.subr.mxu0 0.0
    %209 = vmatpush2.msra.mxu0 0.0
    %210 = vmatprep.subr.mxu0 0.0
    %211 = vmatpush2.msra.mxu0 0.0
    %212 = vmatprep.subr.mxu0 0.0
    %213 = vmatpush2.msra.mxu0 0.0
    %214 = vmatprep.subr.mxu0 0.0
    %215 = vmatpush2.msra.mxu0 0.0
    %216 = vmatprep.subr.mxu0 0.0
    %217 = vmatpush2.msra.mxu0 0.0
    %218 = vmatprep.subr.mxu0 0.0
    %219 = vmatpush2.msra.mxu0 0.0
    %220 = vmatprep.subr.mxu0 0.0
    %221 = vmatpush2.msra.mxu0 0.0
    %222 = vmatprep.subr.mxu0 0.0
    %223 = vmatpush2.msra.mxu0 0.0
    %224 = vmatprep.subr.mxu0 0.0
    %225 = vmatpush2.msra.mxu0 0.0
    %226 = vmatprep.mubr.f32.mxu0 0.0
    %227 = vmatmul.mubr.f32.gmra.mxu0 %v151
    %v228 = vpop.f32.mrf.mxu0
    %v229 = vadd.f32 %v132, %v228
    %v230 = vpop.f32.mrf.mxu0
    %v231 = vadd.f32 %v132, %v230
    %232 = vmatprep.mubr.f32.mxu0 0.0
    %233 = vmatmul.mubr.f32.gmra.mxu0 %v154
    %v234 = vpop.f32.mrf.mxu0
    %v235 = vadd.f32 %v137, %v234
    %v236 = vpop.f32.mrf.mxu0
    %v237 = vadd.f32 %v137, %v236
    %238 = vmatprep.mubr.f32.mxu0 0.0
    %239 = vmatmul.mubr.f32.gmra.mxu0 %v157
    %v240 = vpop.f32.mrf.mxu0
    %v241 = vadd.f32 %v142, %v240
    %v242 = vpop.f32.mrf.mxu0
    %v243 = vadd.f32 %v142, %v242
    %244 = vmatprep.mubr.f32.mxu0 0.0
    %245 = vmatmul.mubr.f32.gmra.mxu0 %v160
    %v246 = vpop.f32.mrf.mxu0
    %v247 = vadd.f32 %v147, %v246
    %v248 = vpop.f32.mrf.mxu0
    %v249 = vadd.f32 %v147, %v248
    %250 = vdwg.mxu0
    %v251 = vxor.u32 %v229, 2147483648
    %v252 = vxor.u32 %v231, 2147483648
    %v253 = vxor.u32 %v235, 2147483648
    %v254 = vxor.u32 %v237, 2147483648
    %v255 = vmul.f32 %v251, 1.442695
    %v256 = vpow.pop %v255
    %v257 = vmul.f32 %v252, 1.442695
    %v258 = vpow.pop %v257
    %v259 = vmul.f32 %v253, 1.442695
    %v260 = vpow.pop %v259
    %v261 = vmul.f32 %v254, 1.442695
    %v262 = vpow.pop %v261
    %v263 = vadd.f32 %v256, 1.0
    %v264 = vadd.f32 %v258, 1.0
    %v265 = vadd.f32 %v260, 1.0
    %v266 = vadd.f32 %v262, 1.0
    %v267 = vrcp.pop %v263
    %v268 = vmul.f32 1.0, %v267
    %v269 = vrcp.pop %v264
    %v270 = vmul.f32 1.0, %v269
    %v271 = vrcp.pop %v265
    %v272 = vmul.f32 1.0, %v271
    %v273 = vrcp.pop %v266
    %v274 = vmul.f32 1.0, %v273
    %v275 = vtanh.pop %v241
    %v276 = vtanh.pop %v243
    %v277 = vtanh.pop %v247
    %v278 = vtanh.pop %v249
    %v279 = vmul.f32 %v268, %v275
    %v280 = vmul.f32 %v270, %v276
    %v281 = vmul.f32 %v272, %v277
    %v282 = vmul.f32 %v274, %v278
    %v283 = vld [vmem:[%s7] sm:$0xff]
    %v284 = vld [vmem:[%s7 + $0x8] sm:$0xff]
    %v285 = vld [vmem:[%s7 + $0x10] sm:$0xff]
    %v286 = vld [vmem:[%s7 + $0x18] sm:$0xff]
    %v287 = vld [vmem:[%s8] sm:$0xff]
    %v288 = vld [vmem:[%s8 + $0x8] sm:$0xff]
    %v289 = vld [vmem:[%s8 + $0x10] sm:$0xff]
    %v290 = vld [vmem:[%s8 + $0x18] sm:$0xff]
    %292 = vset.pattern.permute.xlu0 0
    %293 = vperm.xlu0 %292, %v287
    %v294 = vpop.permute.xlu0 %293
    %297 = vset.pattern.permute.xlu0 0
    %298 = vperm.xlu0 %297, %v288
    %v299 = vpop.permute.xlu0 %298
    %302 = vset.pattern.permute.xlu0 0
    %303 = vperm.xlu0 %302, %v289
    %v304 = vpop.permute.xlu0 %303
    %307 = vset.pattern.permute.xlu0 0
    %308 = vperm.xlu0 %307, %v290
    %v309 = vpop.permute.xlu0 %308
    %vm311 = vcmask 130048
    %v313 = vsel %vm311, %v283, 0
    %v316 = vsel %vm311, %v284, 0
    %v319 = vsel %vm311, %v285, 0
    %v322 = vsel %vm311, %v286, 0
    %324 = vmatprep.subr.mxu0 0.0
    %325 = vmatpush1.msra.mxu0 0.0
    %326 = vmatprep.subr.mxu0 0.0
    %327 = vmatpush1.msra.mxu0 0.0
    %328 = vmatprep.subr.mxu0 0.0
    %329 = vmatpush1.msra.mxu0 0.0
    %330 = vmatprep.subr.mxu0 0.0
    %331 = vmatpush1.msra.mxu0 0.0
    %332 = vmatprep.subr.mxu0 0.0
    %333 = vmatpush1.msra.mxu0 0.0
    %334 = vmatprep.subr.mxu0 0.0
    %335 = vmatpush1.msra.mxu0 0.0
    %336 = vmatprep.subr.mxu0 0.0
    %337 = vmatpush1.msra.mxu0 0.0
    %338 = vmatprep.subr.mxu0 0.0
    %339 = vmatpush1.msra.mxu0 0.0
    %340 = vmatprep.subr.mxu0 0.0
    %341 = vmatpush1.msra.mxu0 0.0
    %342 = vmatprep.subr.mxu0 0.0
    %343 = vmatpush1.msra.mxu0 0.0
    %344 = vmatprep.subr.mxu0 0.0
    %345 = vmatpush1.msra.mxu0 0.0
    %346 = vmatprep.subr.mxu0 0.0
    %347 = vmatpush1.msra.mxu0 0.0
    %348 = vmatprep.subr.mxu0 0.0
    %349 = vmatpush1.msra.mxu0 0.0
    %350 = vmatprep.subr.mxu0 0.0
    %351 = vmatpush1.msra.mxu0 0.0
    %352 = vmatprep.subr.mxu0 %v282
    %353 = vmatpush1.msra.mxu0 %v281
    %354 = vmatprep.subr.mxu0 %v280
    %355 = vmatpush1.msra.mxu0 %v279
    %356 = vmatprep.subr.mxu0 0.0
    %357 = vmatpush2.msra.mxu0 0.0
    %358 = vmatprep.subr.mxu0 0.0
    %359 = vmatpush2.msra.mxu0 0.0
    %360 = vmatprep.subr.mxu0 0.0
    %361 = vmatpush2.msra.mxu0 0.0
    %362 = vmatprep.subr.mxu0 0.0
    %363 = vmatpush2.msra.mxu0 0.0
    %364 = vmatprep.subr.mxu0 0.0
    %365 = vmatpush2.msra.mxu0 0.0
    %366 = vmatprep.subr.mxu0 0.0
    %367 = vmatpush2.msra.mxu0 0.0
    %368 = vmatprep.subr.mxu0 0.0
    %369 = vmatpush2.msra.mxu0 0.0
    %370 = vmatprep.subr.mxu0 0.0
    %371 = vmatpush2.msra.mxu0 0.0
    %372 = vmatprep.subr.mxu0 0.0
    %373 = vmatpush2.msra.mxu0 0.0
    %374 = vmatprep.subr.mxu0 0.0
    %375 = vmatpush2.msra.mxu0 0.0
    %376 = vmatprep.subr.mxu0 0.0
    %377 = vmatpush2.msra.mxu0 0.0
    %378 = vmatprep.subr.mxu0 0.0
    %379 = vmatpush2.msra.mxu0 0.0
    %380 = vmatprep.subr.mxu0 0.0
    %381 = vmatpush2.msra.mxu0 0.0
    %382 = vmatprep.subr.mxu0 0.0
    %383 = vmatpush2.msra.mxu0 0.0
    %384 = vmatprep.subr.mxu0 0.0
    %385 = vmatpush2.msra.mxu0 0.0
    %386 = vmatprep.subr.mxu0 0.0
    %387 = vmatpush2.msra.mxu0 0.0
    %388 = vmatprep.mubr.f32.mxu0 0.0
    %389 = vmatmul.mubr.f32.gmra.mxu0 %v313
    %v390 = vpop.f32.mrf.mxu0
    %v391 = vadd.f32 %v294, %v390
    %v392 = vpop.f32.mrf.mxu0
    %v393 = vadd.f32 %v294, %v392
    %394 = vmatprep.mubr.f32.mxu0 0.0
    %395 = vmatmul.mubr.f32.gmra.mxu0 %v316
    %v396 = vpop.f32.mrf.mxu0
    %v397 = vadd.f32 %v299, %v396
    %v398 = vpop.f32.mrf.mxu0
    %v399 = vadd.f32 %v299, %v398
    %400 = vmatprep.mubr.f32.mxu0 0.0
    %401 = vmatmul.mubr.f32.gmra.mxu0 %v319
    %v402 = vpop.f32.mrf.mxu0
    %v403 = vadd.f32 %v304, %v402
    %v404 = vpop.f32.mrf.mxu0
    %v405 = vadd.f32 %v304, %v404
    %406 = vmatprep.mubr.f32.mxu0 0.0
    %407 = vmatmul.mubr.f32.gmra.mxu0 %v322
    %v408 = vpop.f32.mrf.mxu0
    %v409 = vadd.f32 %v309, %v408
    %v410 = vpop.f32.mrf.mxu0
    %v411 = vadd.f32 %v309, %v410
    %412 = vdwg.mxu0
    %413 = vst [vmem:[#allocation2] sm:$0xff] %v391
    %414 = vst [vmem:[#allocation2 + $0x8] sm:$0xff] %v393
    %415 = vst [vmem:[#allocation2 + $0x10] sm:$0xff] %v397
    %416 = vst [vmem:[#allocation2 + $0x18] sm:$0xff] %v399
    %417 = vst [vmem:[#allocation2 + $0x20] sm:$0xff] %v403
    %418 = vst [vmem:[#allocation2 + $0x28] sm:$0xff] %v405
    %419 = vst [vmem:[#allocation2 + $0x30] sm:$0xff] %v409
    %420 = vst [vmem:[#allocation2 + $0x38] sm:$0xff] %v411
    // Predicated region
    $region38: #{tpu_custom_call.1} parent=1 // pred_check
      _
    $region39: #{tpu_custom_call.1} parent=1 // pred_check_branch
      %422 = sbr.rel (0) target = $region41
    $region40: #{tpu_custom_call.1} parent=1 // pred_region
      %s424 = ssub.s32 1024, 1024
      %425 = vsyncadd [#allocation3], %s424
      %s426 = sshll.u32 [#allocation2], 4
      %s427 = int_to_ptr.vmem [resolvable:$true] %s426
      %432 = dma.vmem_to_hbm [thread:$0]  %s427, 1024, %s9, [#allocation3], 256, 256, 16
    $region41: #{tpu_custom_call.1} parent=1 // pred_fallthru
      _
    // Predicated region
    $region42: #{tpu_custom_call.1} parent=1 // pred_check
      _
    $region43: #{tpu_custom_call.1} parent=1 // pred_check_branch
      %434 = sbr.rel (0) target = $region45
    $region44: #{tpu_custom_call.1} parent=1 // pred_region
      %435 = dma.done [#allocation3], 1024
    $region45: #{tpu_custom_call.1} parent=1 // pred_fallthru
      _
    %436 = vsyncpa [#allocation3], 1

</llo_original>
